<compile_context>
chip_gen: v7x
topology: tpu7x:2x2x1
jax: 0.10.0
libtpu: 0.0.40
codegen_flags: <defaults>
</compile_context>

<pallas_src>
import math

import jax
import jax.numpy as jnp
from jax.experimental import pallas as pl
from jax.experimental.pallas import tpu as pltpu

EPS = 1e-8

# Per-input-block VMEM budget per pipeline buffer (2 inputs x 2 buffers + temps
# ~= 10-16 MiB f32 at this setting, comfortably under the 32 MiB limit below).
_BLOCK_BUDGET_BYTES = 2 * 1024 * 1024
_MAX_TD = 2048          # cap on the lane (reduction) tile; multiple of 128
_VMEM_LIMIT_BYTES = 32 * 1024 * 1024


def _choose_tiles(R, D, itemsize, max_td):
    """Pick (row_tile, feature_tile) from the VMEM budget."""
    # Sublane quantum by dtype width (f32: 8, bf16: 16, int8/fp8: 32).
    sub = {4: 8, 2: 16, 1: 32}.get(itemsize, 8)
    # Feature (reduction) tile: full D when modest, else `max_td`-lane chunks.
    td = D if D <= max_td else max_td
    # Budget as if f32 (covers accumulation temps for narrow dtypes).
    eff_itemsize = 4
    tr = _BLOCK_BUDGET_BYTES // (td * eff_itemsize)
    tr = max(sub, (tr // sub) * sub)
    # Don't exceed the (sublane-rounded) number of rows.
    r_cap = ((R + sub - 1) // sub) * sub
    tr = min(tr, r_cap)
    return tr, td


def _single_block_kernel(x_ref, y_ref, o_ref):
    """D fits in one feature tile: no reduction grid axis, no scratch."""
    x = x_ref[...]
    y = y_ref[...]
    xy = jnp.sum(x * y, axis=-1, keepdims=True, dtype=jnp.float32)
    xx = jnp.sum(x * x, axis=-1, keepdims=True, dtype=jnp.float32)
    yy = jnp.sum(y * y, axis=-1, keepdims=True, dtype=jnp.float32)
    denom = jnp.maximum(jnp.sqrt(xx * yy), EPS)
    o_ref[...] = (1.0 - xy / denom).astype(o_ref.dtype)


def _make_multi_block_kernel(D, td):
    """D is split across a reduction grid axis; accumulate in f32 scratch."""
    need_mask = (D % td) != 0  # static: only emit lane masking when required

    def kernel(x_ref, y_ref, o_ref, xy_acc, xx_acc, yy_acc):
        k = pl.program_id(1)
        k_last = pl.num_programs(1) - 1

        @pl.when(k == 0)
        def _init():
            xy_acc[...] = jnp.zeros_like(xy_acc)
            xx_acc[...] = jnp.zeros_like(xx_acc)
            yy_acc[...] = jnp.zeros_like(yy_acc)

        x = x_ref[...]
        y = y_ref[...]
        if need_mask:
            # Zero lanes past the end of D on the (partial) last feature block.
            valid = D - k * td
            lane = jax.lax.broadcasted_iota(jnp.int32, x.shape, dimension=1)
            m = lane < valid
            x = jnp.where(m, x, 0)
            y = jnp.where(m, y, 0)

        # Partial row-wise reductions, accumulated in f32 (VPU mul + XLU reduce).
        xy_acc[...] += jnp.sum(x * y, axis=-1, keepdims=True, dtype=jnp.float32)
        xx_acc[...] += jnp.sum(x * x, axis=-1, keepdims=True, dtype=jnp.float32)
        yy_acc[...] += jnp.sum(y * y, axis=-1, keepdims=True, dtype=jnp.float32)

        @pl.when(k == k_last)
        def _finalize():
            denom = jnp.maximum(jnp.sqrt(xx_acc[...] * yy_acc[...]), EPS)
            o_ref[...] = (1.0 - xy_acc[...] / denom).astype(o_ref.dtype)

    return kernel


def cosine_distance(x, y, *, max_td=_MAX_TD):
    """1 - cosine_similarity(x, y) along the last axis (PyTorch semantics)."""
    assert x.shape == y.shape, "x and y must have the same shape (no broadcasting)"
    *lead, D = x.shape
    R = math.prod(lead) if lead else 1

    out_dtype = jnp.promote_types(x.dtype, y.dtype)
    x2 = x.reshape(R, D).astype(out_dtype)
    y2 = y.reshape(R, D).astype(out_dtype)

    tr, td = _choose_tiles(R, D, jnp.dtype(out_dtype).itemsize, max_td)
    n_r = pl.cdiv(R, tr)
    n_k = pl.cdiv(D, td)

    if n_k == 1:
        # Fast path: whole reduction in one tile -> 1-D grid, no accumulators.
        grid_spec = pltpu.PrefetchScalarGridSpec(
            num_scalar_prefetch=0,
            grid=(n_r,),
            in_specs=[
                pl.BlockSpec((tr, D), lambda i: (i, 0)),
                pl.BlockSpec((tr, D), lambda i: (i, 0)),
            ],
            out_specs=pl.BlockSpec((tr, 1), lambda i: (i, 0)),
        )
        kernel = _single_block_kernel
        dim_sem = ("parallel",)
    else:
        grid_spec = pltpu.PrefetchScalarGridSpec(
            num_scalar_prefetch=0,
            grid=(n_r, n_k),
            in_specs=[
                pl.BlockSpec((tr, td), lambda i, k: (i, k)),
                pl.BlockSpec((tr, td), lambda i, k: (i, k)),
            ],
            out_specs=pl.BlockSpec((tr, 1), lambda i, k: (i, 0)),
            scratch_shapes=[pltpu.VMEM((tr, 1), jnp.float32)] * 3,
        )
        kernel = _make_multi_block_kernel(D, td)
        dim_sem = ("parallel", "arbitrary")

    out = pl.pallas_call(
        kernel,
        out_shape=jax.ShapeDtypeStruct((R, 1), out_dtype),
        grid_spec=grid_spec,
        compiler_params=pltpu.CompilerParams(
            dimension_semantics=dim_sem,
            vmem_limit_bytes=_VMEM_LIMIT_BYTES,
        ),
    )(x2, y2)

    return out.reshape(tuple(lead))


def _reference(x, y):
    xf = x.astype(jnp.float32)
    yf = y.astype(jnp.float32)
    xy = jnp.sum(xf * yf, axis=-1)
    nx = jnp.sqrt(jnp.sum(xf * xf, axis=-1))
    ny = jnp.sqrt(jnp.sum(yf * yf, axis=-1))
    return 1.0 - xy / jnp.maximum(nx * ny, EPS)


if __name__ == "__main__":
    key = jax.random.PRNGKey(0)
    k1, k2, k3, k4, k5, k6 = jax.random.split(key, 6)

    # 1) Shapes consistent with the module's forward (reduce over hidden axis).
    x = jax.random.normal(k1, (2, 8, 32), dtype=jnp.float32)
    y = jax.random.normal(k2, (2, 8, 32), dtype=jnp.float32)
    out = jax.block_until_ready(cosine_distance(x, y))
    assert out.shape == (2, 8), out.shape
    assert jnp.allclose(out, _reference(x, y), atol=1e-5, rtol=1e-5)

    # 2) Row count not a multiple of the row tile -> partial row blocks.
    x2 = jax.random.normal(k3, (3, 5, 32), dtype=jnp.float32)
    y2 = jax.random.normal(k4, (3, 5, 32), dtype=jnp.float32)
    out2 = jax.block_until_ready(cosine_distance(x2, y2))
    assert out2.shape == (3, 5), out2.shape
    assert jnp.allclose(out2, _reference(x2, y2), atol=1e-5, rtol=1e-5)

    # 3) Multi-block reduction path (small max_td forces the accumulator kernel
    #    and a masked partial last feature block: 160 = 128 + 32).
    x3 = jax.random.normal(k5, (3, 5, 160), dtype=jnp.float32)
    y3 = jax.random.normal(k6, (3, 5, 160), dtype=jnp.float32)
    out3 = jax.block_until_ready(cosine_distance(x3, y3, max_td=128))
    assert out3.shape == (3, 5), out3.shape
    assert jnp.allclose(out3, _reference(x3, y3), atol=1e-5, rtol=1e-5)

    # 4) bf16 inputs (products in bf16, f32 accumulation, bf16 output).
    xb = x.astype(jnp.bfloat16)
    yb = y.astype(jnp.bfloat16)
    outb = jax.block_until_ready(cosine_distance(xb, yb))
    assert outb.dtype == jnp.bfloat16 and outb.shape == (2, 8)
    assert jnp.allclose(outb.astype(jnp.float32), _reference(xb, yb), atol=3e-2)

    print("KERNEL_OK")
</pallas_src>

<mosaic_0001>
module attributes {stable_mosaic.version = 11 : i64} {
  func.func @_single_block_kernel(%arg0: i32, %arg1: memref<16x32xf32, #tpu.memory_space<vmem>>, %arg2: memref<16x32xf32, #tpu.memory_space<vmem>>, %arg3: memref<16x1xf32, #tpu.memory_space<vmem>>) attributes {dimension_semantics = [#tpu.dimension_semantics<parallel>], iteration_bounds = array<i64: 1>, scalar_prefetch = 0 : i64, scratch_operands = 0 : i64, tpu.core_type = #tpu.core_type<tc>, window_params = [{transform_indices = @transform_0, window_bounds = array<i64: 16, 32>}, {transform_indices = @transform_1, window_bounds = array<i64: 16, 32>}, {transform_indices = @transform_2, window_bounds = array<i64: 16, 1>}]} {
    %c0 = arith.constant 0 : index
    %c0_0 = arith.constant 0 : index
    %0 = vector.load %arg1[%c0, %c0_0] : memref<16x32xf32, #tpu.memory_space<vmem>>, vector<16x32xf32>
    %c0_1 = arith.constant 0 : index
    %c0_2 = arith.constant 0 : index
    %1 = vector.load %arg2[%c0_1, %c0_2] : memref<16x32xf32, #tpu.memory_space<vmem>>, vector<16x32xf32>
    %2 = arith.mulf %0, %1 : vector<16x32xf32>
    %cst = arith.constant dense<0.000000e+00> : vector<16xf32>
    %3 = vector.multi_reduction <add>, %2, %cst [1] : vector<16x32xf32> to vector<16xf32>
    %4 = vector.shape_cast %3 : vector<16xf32> to vector<16x1xf32>
    %5 = arith.mulf %0, %0 : vector<16x32xf32>
    %cst_3 = arith.constant dense<0.000000e+00> : vector<16xf32>
    %6 = vector.multi_reduction <add>, %5, %cst_3 [1] : vector<16x32xf32> to vector<16xf32>
    %7 = vector.shape_cast %6 : vector<16xf32> to vector<16x1xf32>
    %8 = arith.mulf %1, %1 : vector<16x32xf32>
    %cst_4 = arith.constant dense<0.000000e+00> : vector<16xf32>
    %9 = vector.multi_reduction <add>, %8, %cst_4 [1] : vector<16x32xf32> to vector<16xf32>
    %10 = vector.shape_cast %9 : vector<16xf32> to vector<16x1xf32>
    %11 = arith.mulf %7, %10 : vector<16x1xf32>
    %12 = math.sqrt %11 : vector<16x1xf32>
    %cst_5 = arith.constant 9.99999993E-9 : f32
    %13 = vector.broadcast %cst_5 : f32 to vector<16x1xf32>
    %14 = arith.maximumf %12, %13 : vector<16x1xf32>
    %15 = arith.divf %4, %14 : vector<16x1xf32>
    %cst_6 = arith.constant 1.000000e+00 : f32
    %16 = vector.broadcast %cst_6 : f32 to vector<16x1xf32>
    %17 = arith.subf %16, %15 : vector<16x1xf32>
    %c0_7 = arith.constant 0 : index
    %c0_8 = arith.constant 0 : index
    %18 = vector.load %arg3[%c0_7, %c0_8] : memref<16x1xf32, #tpu.memory_space<vmem>>, vector<16x1xf32>
    tpu.vector_store %arg3[%c0_7, %c0_8], %17 {strides = array<i32>} : memref<16x1xf32, #tpu.memory_space<vmem>>, vector<16x1xf32>,
    return
  }
  func.func @transform_0(%arg0: i32) -> (i32, i32) {
    %c0_i32 = arith.constant 0 : i32
    %c0_i32_0 = arith.constant 0 : i32
    return %arg0, %c0_i32 : i32, i32
  }
  func.func @transform_1(%arg0: i32) -> (i32, i32) {
    %c0_i32 = arith.constant 0 : i32
    %c0_i32_0 = arith.constant 0 : i32
    return %arg0, %c0_i32 : i32, i32
  }
  func.func @transform_2(%arg0: i32) -> (i32, i32) {
    %c0_i32 = arith.constant 0 : i32
    %c0_i32_0 = arith.constant 0 : i32
    return %arg0, %c0_i32 : i32, i32
  }
}

</mosaic_0001>

<llo_original>
// kernel: tpu_custom_call.1
$region0: #{tpu_custom_call.1}
  #allocation0 [shape = 'u32[]', space=smem, size = 0x4, offset = 0x4, fixed_abs, tag = 'smem constant byte address 0x4 - core index']
  #allocation1 [shape = 'u32[144,128]{1,0:T(1,128)}', space=vmem, size = 0x12000, scoped, tag = 'internal scratch']
  %s0 = inlined_call_operand.hbm [shape: f32[16,32], index: 0, kind: input, shape index: {}]
  %s1 = inlined_call_operand.hbm [shape: f32[16,32], index: 1, kind: input, shape index: {}]
  %s2 = inlined_call_operand.vmem [shape: f32[16,1], index: 2, kind: output, shape index: {}]
  %s3 = sld [smem:[#allocation0]]
  $region26: #{tpu_custom_call.1} parent=0
    _
  %s5 = ssub.s32 1, %s3
  %s6 = scalar_select 0, %s5, %s3
  $region1: #{tpu_custom_call.1} parent=0
    #allocation2 [shape = 'u8[8192]{0}', space=vmem, size = 0x2000, scoped, tag = 'input window, operand 0, single buffered']
    #allocation3 [shape = 's32[1]{0}', space=sflag, size = 0x4, scoped, tag = 'scoped memory for tpu_custom_call.1']
    #allocation4 [shape = 'u8[8192]{0}', space=vmem, size = 0x2000, scoped, tag = 'input window, operand 1, single buffered']
    #allocation5 [shape = 's32[1]{0}', space=sflag, size = 0x4, scoped, tag = 'scoped memory for tpu_custom_call.1']
    %7 = vsyncpa [#allocation3], 0
    %8 = vsyncpa [#allocation5], 0
    // Predicated region
    $region2: #{tpu_custom_call.1} parent=1 // pred_check
      _
    $region3: #{tpu_custom_call.1} parent=1 // pred_check_branch
      %10 = sbr.rel (0) target = $region5
    $region4: #{tpu_custom_call.1} parent=1 // pred_region
      %s12 = ssub.s32 256, 256
      %13 = vsyncadd [#allocation3], %s12
      %s14 = sshll.u32 [#allocation2], 4
      %s15 = int_to_ptr.vmem [resolvable:$true] %s14
      %20 = dma.hbm_to_vmem [thread:$0]  %s0, 256, %s15, [#allocation3], 128, 128, 8
    $region5: #{tpu_custom_call.1} parent=1 // pred_fallthru
      _
    // Predicated region
    $region6: #{tpu_custom_call.1} parent=1 // pred_check
      _
    $region7: #{tpu_custom_call.1} parent=1 // pred_check_branch
      %22 = sbr.rel (0) target = $region9
    $region8: #{tpu_custom_call.1} parent=1 // pred_region
      %s24 = ssub.s32 256, 256
      %25 = vsyncadd [#allocation5], %s24
      %s26 = sshll.u32 [#allocation4], 4
      %s27 = int_to_ptr.vmem [resolvable:$true] %s26
      %32 = dma.hbm_to_vmem [thread:$0]  %s1, 256, %s27, [#allocation5], 128, 128, 8
    $region9: #{tpu_custom_call.1} parent=1 // pred_fallthru
      _
    // Predicated region
    $region10: #{tpu_custom_call.1} parent=1 // pred_check
      _
    $region11: #{tpu_custom_call.1} parent=1 // pred_check_branch
      %34 = sbr.rel (0) target = $region13
    $region12: #{tpu_custom_call.1} parent=1 // pred_region
      %35 = dma.done [#allocation3], 256
    $region13: #{tpu_custom_call.1} parent=1 // pred_fallthru
      _
    // Predicated region
    $region14: #{tpu_custom_call.1} parent=1 // pred_check
      _
    $region15: #{tpu_custom_call.1} parent=1 // pred_check_branch
      %37 = sbr.rel (0) target = $region17
    $region16: #{tpu_custom_call.1} parent=1 // pred_region
      %38 = dma.done [#allocation5], 256
    $region17: #{tpu_custom_call.1} parent=1 // pred_fallthru
      _
    %v39 = vld [vmem:[#allocation2] sm:$0xff]
    %v40 = vld [vmem:[#allocation2 + $0x8] sm:$0xff]
    %v41 = vld [vmem:[#allocation4] sm:$0xff]
    %v42 = vld [vmem:[#allocation4 + $0x8] sm:$0xff]
    %v43 = vmul.f32 %v39, %v41
    %v44 = vmul.f32 %v40, %v42
    %vm45 = vcmask 261120
    %v46 = vsel %vm45, %v43, 0.0
    %47 = vadd.xlane.f32.xlu0 %v46
    %v48 = vpop.xlane.xlu0 %47
    %v49 = vsel %vm45, %v44, 0.0
    %50 = vadd.xlane.f32.xlu0 %v49
    %v51 = vpop.xlane.xlu0 %50
    %v52 = vmul.f32 %v39, %v39
    %v53 = vmul.f32 %v40, %v40
    %v54 = vsel %vm45, %v52, 0.0
    %55 = vadd.xlane.f32.xlu0 %v54
    %v56 = vpop.xlane.xlu0 %55
    %v57 = vsel %vm45, %v53, 0.0
    %58 = vadd.xlane.f32.xlu0 %v57
    %v59 = vpop.xlane.xlu0 %58
    %v60 = vmul.f32 %v41, %v41
    %v61 = vmul.f32 %v42, %v42
    %v62 = vsel %vm45, %v60, 0.0
    %63 = vadd.xlane.f32.xlu0 %v62
    %v64 = vpop.xlane.xlu0 %63
    %v65 = vsel %vm45, %v61, 0.0
    %66 = vadd.xlane.f32.xlu0 %v65
    %v67 = vpop.xlane.xlu0 %66
    %v68 = vmul.f32 %v56, %v64
    %v69 = vmul.f32 %v59, %v67
    %v70 = vrsqrt.pop %v68
    %v71 = vmul.f32 %v68, %v70
    %vm72 = vcmp.eq.f32.partialorder %v68, inf
    %v73 = vsel %vm72, %v68, %v71
    %vm74 = vcmp.eq.f32.partialorder %v68, 0.0
    %v75 = vand.u32 %v68, 2147483648
    %v76 = vsel %vm74, %v75, %v73
    %v77 = vrsqrt.pop %v69
    %v78 = vmul.f32 %v69, %v77
    %vm79 = vcmp.eq.f32.partialorder %v69, inf
    %v80 = vsel %vm79, %v69, %v78
    %vm81 = vcmp.eq.f32.partialorder %v69, 0.0
    %v82 = vand.u32 %v69, 2147483648
    %v83 = vsel %vm81, %v82, %v80
    %v84 = vmax.f32 %v76, 1e-08
    %v85 = vmax.f32 %v83, 1e-08
    %v86 = vrcp.pop %v84
    %v87 = vmul.f32 %v48, %v86
    %v88 = vrcp.pop %v85
    %v89 = vmul.f32 %v51, %v88
    %v90 = vsub.f32 1.0, %v87
    %v91 = vsub.f32 1.0, %v89
    %vm92 = vcmask 7168
    %93 = vst.msk [vmem:[%s2] sm:$0xff] %vm92, %v90
    %94 = vst.msk [vmem:[%s2 + $0x8] sm:$0xff] %vm92, %v91
    // Predicated region
    $region18: #{tpu_custom_call.1} parent=1 // pred_check
      _
    $region19: #{tpu_custom_call.1} parent=1 // pred_check_branch
      %96 = sbr.rel (0) target = $region21
    $region20: #{tpu_custom_call.1} parent=1 // pred_region
      _
    $region21: #{tpu_custom_call.1} parent=1 // pred_fallthru
      _
    // Predicated region
    $region22: #{tpu_custom_call.1} parent=1 // pred_check
      _
    $region23: #{tpu_custom_call.1} parent=1 // pred_check_branch
      %98 = sbr.rel (0) target = $region25
    $region24: #{tpu_custom_call.1} parent=1 // pred_region
      _
    $region25: #{tpu_custom_call.1} parent=1 // pred_fallthru
      _
    %99 = vsyncpa [#allocation3], 1
    %100 = vsyncpa [#allocation5], 1

</llo_original>
